<compile_context>
chip_gen: v7x
topology: tpu7x:2x2x1
jax: 0.10.0
libtpu: 0.0.40
codegen_flags: <defaults>
</compile_context>

<pallas_src>
import functools

import jax
import jax.numpy as jnp
from jax.experimental import pallas as pl
from jax.experimental.pallas import tpu as pltpu


def _round_up(x, m):
    return ((x + m - 1) // m) * m


def _pad_to(x, shape):
    pads = tuple((0, t - s) for s, t in zip(x.shape, shape))
    if any(p[1] for p in pads):
        x = jnp.pad(x, pads)
    return x


def _attention_kernel(feat_ref, att2_ref, w_emb_ref, b_emb_ref,
                      w_fa_ref, w_full_ref, out_ref, *, n_valid):
    Bt, Np, Fp = feat_ref.shape

    feats = feat_ref[...]                                   # (Bt, Np, Fp) compute dtype
    feats2d = feats.reshape(Bt * Np, Fp)                    # free relabel (Np % sublane == 0)

    # att_embed: Linear + ReLU (Dropout(0.5) = identity in eval mode).
    emb = jnp.dot(feats2d, w_emb_ref[...],
                  preferred_element_type=jnp.float32)       # MXU, f32 accumulation
    emb = jnp.maximum(emb + b_emb_ref[...], 0.0)            # (Bt*Np, Dp) f32

    # features_att (its bias was folded into att2 in the wrapper).
    att1 = jnp.dot(emb.astype(w_fa_ref.dtype), w_fa_ref[...],
                   preferred_element_type=jnp.float32)      # (Bt*Np, Ap) f32
    att1 = att1.reshape(Bt, Np, att1.shape[-1])             # free relabel (Np % 8 == 0)

    # decoder_att term (precomputed per batch row in the wrapper), broadcast over regions.
    pre = jnp.maximum(att1 + att2_ref[...][:, None, :], 0.0)   # (Bt, Np, Ap) f32

    # full_att as a VPU multiply + lane reduce (b_full dropped: softmax-invariant).
    # Region axis N stays on sublanes from here on (no lane<->sublane relayout).
    e = jnp.sum(pre * w_full_ref[...], axis=-1, keepdims=True)  # (Bt, Np, 1) f32

    if n_valid != Np:  # mask zero-padded regions out of the softmax
        pos = jax.lax.broadcasted_iota(jnp.int32, (1, Np, 1), 1)
        e = jnp.where(pos < n_valid, e, -1e30)

    # Softmax over the region (sublane) axis; denominator via the EUP
    # approximate reciprocal (EUP slot is otherwise idle).
    m = jnp.max(e, axis=1, keepdims=True)                   # (Bt, 1, 1)
    p = jnp.exp(e - m)                                      # (Bt, Np, 1)
    alpha = p * pl.reciprocal(jnp.sum(p, axis=1, keepdims=True), approx=True)

    # context: VPU broadcast-multiply + sublane (XLU) reduce. Keeps the already
    # saturated MXU stream free of Bt low-occupancy M=1 matmuls; alpha stays f32.
    ctx = jnp.sum(feats.astype(jnp.float32) * alpha, axis=1)    # (Bt, Fp) f32
    out_ref[...] = ctx.astype(out_ref.dtype)


def prepare_params(params, *, compute_dtype=jnp.bfloat16):
    """Cast / pad / pack the weights once (hoisted out of the per-call hot path)."""
    F, D = params["w_emb"].shape
    A = params["w_fa"].shape[1]
    # Lane-dense padding: multiples of 128 (256 preferred on v6e/v7x when the
    # true dims are already large).
    Fp, Dp, Ap = (_round_up(d, 128) for d in (F, D, A))
    w_emb = _pad_to(params["w_emb"], (Fp, Dp)).astype(compute_dtype)
    b_emb = _pad_to(params["b_emb"].reshape(1, D), (1, Dp)).astype(jnp.float32)
    w_fa = _pad_to(params["w_fa"], (Dp, Ap)).astype(compute_dtype)
    # decoder_att weight stays f32 for the whole-batch XLA matmul in the wrapper;
    # features_att's bias is folded into its bias (exact).
    w_da = _pad_to(params["w_da"], (D, Ap)).astype(jnp.float32)
    bias = _pad_to((params["b_da"] + params["b_fa"]).reshape(1, A),
                   (1, Ap)).astype(jnp.float32)
    # full_att weight as a (1, A) row; b_full dropped (softmax-invariant -> exact).
    w_full = _pad_to(params["w_full"].reshape(1, A), (1, Ap)).astype(jnp.float32)
    return dict(w_emb=w_emb, b_emb=b_emb, w_fa=w_fa, w_da=w_da,
                bias_da_fa=bias, w_full=w_full,
                padded=(Fp, Dp, Ap), compute_dtype=compute_dtype)


def _choose_bt(B, Np, Fp, Dp, Ap, row_target, compute_bytes, vmem_block_budget):
    SUB = 8
    if B <= SUB:
        return B
    # ~row_target (Bt*N) rows per MXU matmul.
    bt = max(SUB, (max(1, row_target // max(Np, 1)) // SUB) * SUB)
    # >= 2 grid steps whenever B allows it, so both v7x TensorCores get work.
    bt = min(bt, max(SUB, (pl.cdiv(B, 2) // SUB) * SUB))
    # Per-step VMEM budget: pipelined blocks (x2 buffers) + f32 intermediates.
    per_row = (2 * (Np * Fp * compute_bytes + Ap * 4 + Fp * 4)
               + Np * (Dp + 2 * Ap + Fp + 8) * 4)
    bt = min(bt, max(SUB, int(vmem_block_budget // per_row) // SUB * SUB))
    # Rebalance so the padded batch is split evenly across the steps.
    steps = pl.cdiv(B, bt)
    return int(max(SUB, _round_up(pl.cdiv(B, steps), SUB)))


def visual_attention_c(image_features, decoder_hidden, prep, *,
                       row_target=1024, vmem_block_budget=24 << 20):
    B, N, F = image_features.shape
    cdt = prep["compute_dtype"]
    Fp, Dp, Ap = prep["padded"]
    cb = jnp.dtype(cdt).itemsize
    sub = 16 if cb < 4 else 8               # sublane pack for the feats tile
    Np = _round_up(N, sub)

    # decoder_att hoisted to one whole-batch XLA matmul (features_att bias folded in).
    att2 = decoder_hidden.astype(jnp.float32) @ prep["w_da"] + prep["bias_da_fa"]

    feats = _pad_to(image_features.astype(cdt), (B, Np, Fp))

    Bt = _choose_bt(B, Np, Fp, Dp, Ap, row_target, cb, vmem_block_budget)
    Bp = pl.cdiv(B, Bt) * Bt
    if Bp != B:
        feats = jnp.pad(feats, ((0, Bp - B), (0, 0), (0, 0)))
        att2 = jnp.pad(att2, ((0, Bp - B), (0, 0)))

    # Explicit scoped-VMEM limit (defaults are only 16 MiB v5e / 32 MiB v6e+).
    block_bytes = 2 * Bt * (Np * Fp * cb + Ap * 4 + Fp * 4)
    weight_bytes = (Fp * Dp + Dp * Ap) * cb + (Dp + Ap + 128) * 4
    interm_bytes = Bt * Np * (Dp + 2 * Ap + Fp + 8) * 4
    est = block_bytes + weight_bytes + interm_bytes
    vmem_limit = int(min(max(2 * est, 32 << 20), 56 << 20))   # stay under v7x's 64 MiB

    kernel = functools.partial(_attention_kernel, n_valid=N)

    def call(single_buffer_weights):
        if single_buffer_weights:
            # Constant-index weight blocks are never re-fetched -> single-buffer
            # them (halves their VMEM cost; most valuable on v7x's 64 MiB VMEM).
            const = lambda shape: pl.BlockSpec(shape, lambda b: (0,) * len(shape),
                                               pipeline_mode=pl.Buffered(1))
        else:
            const = lambda shape: pl.BlockSpec(shape, lambda b: (0,) * len(shape))
        return pl.pallas_call(
            kernel,
            out_shape=jax.ShapeDtypeStruct((Bp, Fp), jnp.float32),
            grid_spec=pltpu.PrefetchScalarGridSpec(
                num_scalar_prefetch=0,
                grid=(Bp // Bt,),
                in_specs=[
                    pl.BlockSpec((Bt, Np, Fp), lambda b: (b, 0, 0)),  # image features
                    pl.BlockSpec((Bt, Ap), lambda b: (b, 0)),         # precomputed att2
                    const((Fp, Dp)),    # w_emb
                    const((1, Dp)),     # b_emb
                    const((Dp, Ap)),    # w_fa
                    const((1, Ap)),     # w_full row
                ],
                out_specs=pl.BlockSpec((Bt, Fp), lambda b: (b, 0)),
            ),
            compiler_params=pltpu.CompilerParams(
                dimension_semantics=("parallel",),
                vmem_limit_bytes=vmem_limit),
        )(feats, att2, prep["w_emb"], prep["b_emb"], prep["w_fa"], prep["w_full"])

    try:
        out = call(True)
    except Exception:
        # pipeline_mode / Buffered(1) unsupported on this jax version: fall back
        # to default double-buffered weight blocks (identical results).
        out = call(False)

    return out[:B, :F]


def reference(image_features, decoder_hidden, params):
    emb = jnp.maximum(image_features @ params["w_emb"] + params["b_emb"], 0.0)
    att1 = emb @ params["w_fa"] + params["b_fa"]
    att2 = decoder_hidden @ params["w_da"] + params["b_da"]
    att = (jnp.maximum(att1 + att2[:, None, :], 0.0) @ params["w_full"]
           + params["b_full"])[..., 0]
    alpha = jax.nn.softmax(att, axis=1)
    return jnp.sum(image_features * alpha[..., None], axis=1)


if __name__ == "__main__":
    B, N = 2, 16
    image_features_dim, decoder_dim, attention_dim = 32, 32, 32

    key = jax.random.PRNGKey(0)
    ks = jax.random.split(key, 12)

    def init(k, shape, fan_in):
        return (jax.random.uniform(k, shape, jnp.float32, -1.0, 1.0)
                / jnp.sqrt(jnp.float32(fan_in)))

    params = {
        "w_emb":  init(ks[0], (image_features_dim, decoder_dim), image_features_dim),
        "b_emb":  init(ks[1], (1, decoder_dim), image_features_dim),
        "w_fa":   init(ks[2], (decoder_dim, attention_dim), decoder_dim),
        "b_fa":   init(ks[3], (1, attention_dim), decoder_dim),
        "w_da":   init(ks[4], (decoder_dim, attention_dim), decoder_dim),
        "b_da":   init(ks[5], (1, attention_dim), decoder_dim),
        "w_full": init(ks[6], (attention_dim, 1), attention_dim),
        "b_full": init(ks[7], (1, 1), attention_dim),
    }

    image_features = jax.random.normal(ks[8], (B, N, image_features_dim), jnp.float32)
    decoder_hidden = jax.random.normal(ks[9], (B, decoder_dim), jnp.float32)

    ref = reference(image_features, decoder_hidden, params)

    # Weights are cast / padded once and reused across calls (hoisted hot path).
    prep_f32 = prepare_params(params, compute_dtype=jnp.float32)
    prep_bf16 = prepare_params(params)      # default: bf16 MXU operands

    # f32 MXU operands (tolerance leaves headroom for the approx EUP reciprocal).
    out = jax.block_until_ready(
        visual_attention_c(image_features, decoder_hidden, prep_f32))
    assert out.shape == (B, image_features_dim)
    assert jnp.allclose(out, ref, atol=2e-3, rtol=2e-3)

    # bf16 MXU operands (default path): f32 accumulation + f32 softmax math.
    out_bf16 = jax.block_until_ready(
        visual_attention_c(image_features, decoder_hidden, prep_bf16))
    assert jnp.allclose(out_bf16, ref, atol=5e-2, rtol=5e-2)

    # Larger batch + non-multiple region count: exercises batch tiling (Bt=8,
    # grid=(3,)), batch padding, and the padded-region softmax mask (N=12 -> 16).
    B2, N2 = 20, 12
    feats2 = jax.random.normal(ks[10], (B2, N2, image_features_dim), jnp.float32)
    dh2 = jax.random.normal(ks[11], (B2, decoder_dim), jnp.float32)
    out2 = jax.block_until_ready(
        visual_attention_c(feats2, dh2, prep_f32, row_target=128))
    ref2 = reference(feats2, dh2, params)
    assert out2.shape == (B2, image_features_dim)
    assert jnp.allclose(out2, ref2, atol=2e-3, rtol=2e-3)

    print("KERNEL_OK")
</pallas_src>

<mosaic_0001>
module attributes {stable_mosaic.version = 11 : i64} {
  func.func @_attention_kernel(%arg0: i32, %arg1: memref<2x16x128xf32, #tpu.memory_space<vmem>>, %arg2: memref<2x128xf32, #tpu.memory_space<vmem>>, %arg3: memref<128x128xf32, #tpu.memory_space<vmem>>, %arg4: memref<1x128xf32, #tpu.memory_space<vmem>>, %arg5: memref<128x128xf32, #tpu.memory_space<vmem>>, %arg6: memref<1x128xf32, #tpu.memory_space<vmem>>, %arg7: memref<2x128xf32, #tpu.memory_space<vmem>>) attributes {dimension_semantics = [#tpu.dimension_semantics<parallel>], iteration_bounds = array<i64: 1>, scalar_prefetch = 0 : i64, scratch_operands = 0 : i64, tpu.core_type = #tpu.core_type<tc>, window_params = [{transform_indices = @transform_0, window_bounds = array<i64: 2, 16, 128>}, {transform_indices = @transform_1, window_bounds = array<i64: 2, 128>}, {pipeline_mode = #tpu.pipeline_mode<synchronous>, transform_indices = @transform_2, window_bounds = array<i64: 128, 128>}, {pipeline_mode = #tpu.pipeline_mode<synchronous>, transform_indices = @transform_3, window_bounds = array<i64: 1, 128>}, {pipeline_mode = #tpu.pipeline_mode<synchronous>, transform_indices = @transform_4, window_bounds = array<i64: 128, 128>}, {pipeline_mode = #tpu.pipeline_mode<synchronous>, transform_indices = @transform_5, window_bounds = array<i64: 1, 128>}, {transform_indices = @transform_6, window_bounds = array<i64: 2, 128>}]} {
    %c0 = arith.constant 0 : index
    %c0_0 = arith.constant 0 : index
    %c0_1 = arith.constant 0 : index
    %0 = vector.load %arg1[%c0, %c0_0, %c0_1] : memref<2x16x128xf32, #tpu.memory_space<vmem>>, vector<2x16x128xf32>
    %1 = vector.shape_cast %0 : vector<2x16x128xf32> to vector<32x128xf32>
    %c0_2 = arith.constant 0 : index
    %c0_3 = arith.constant 0 : index
    %2 = vector.load %arg3[%c0_2, %c0_3] : memref<128x128xf32, #tpu.memory_space<vmem>>, vector<128x128xf32>
    %cst = arith.constant dense<0.000000e+00> : vector<32x128xf32>
    %3 = tpu.matmul %1, %2, %cst {dimension_numbers = #tpu.dot_dimension_numbers<[1], [0], [0], [1], [0, 0, 1, 1], [], []>} : vector<32x128xf32>, vector<128x128xf32>, vector<32x128xf32> -> vector<32x128xf32>
    %c0_4 = arith.constant 0 : index
    %c0_5 = arith.constant 0 : index
    %4 = vector.load %arg4[%c0_4, %c0_5] : memref<1x128xf32, #tpu.memory_space<vmem>>, vector<1x128xf32>
    %5 = vector.broadcast %4 : vector<1x128xf32> to vector<32x128xf32>
    %6 = arith.addf %3, %5 : vector<32x128xf32>
    %cst_6 = arith.constant 0.000000e+00 : f32
    %7 = vector.broadcast %cst_6 : f32 to vector<32x128xf32>
    %8 = arith.maximumf %6, %7 : vector<32x128xf32>
    %c0_7 = arith.constant 0 : index
    %c0_8 = arith.constant 0 : index
    %9 = vector.load %arg5[%c0_7, %c0_8] : memref<128x128xf32, #tpu.memory_space<vmem>>, vector<128x128xf32>
    %cst_9 = arith.constant dense<0.000000e+00> : vector<32x128xf32>
    %10 = tpu.matmul %8, %9, %cst_9 {dimension_numbers = #tpu.dot_dimension_numbers<[1], [0], [0], [1], [0, 0, 1, 1], [], []>} : vector<32x128xf32>, vector<128x128xf32>, vector<32x128xf32> -> vector<32x128xf32>
    %11 = vector.shape_cast %10 : vector<32x128xf32> to vector<2x16x128xf32>
    %c0_10 = arith.constant 0 : index
    %c0_11 = arith.constant 0 : index
    %12 = vector.load %arg2[%c0_10, %c0_11] : memref<2x128xf32, #tpu.memory_space<vmem>>, vector<2x128xf32>
    %13 = vector.shape_cast %12 : vector<2x128xf32> to vector<2x1x128xf32>
    %14 = vector.broadcast %13 : vector<2x1x128xf32> to vector<2x16x128xf32>
    %15 = arith.addf %11, %14 : vector<2x16x128xf32>
    %cst_12 = arith.constant 0.000000e+00 : f32
    %16 = vector.broadcast %cst_12 : f32 to vector<2x16x128xf32>
    %17 = arith.maximumf %15, %16 : vector<2x16x128xf32>
    %c0_13 = arith.constant 0 : index
    %c0_14 = arith.constant 0 : index
    %18 = vector.load %arg6[%c0_13, %c0_14] : memref<1x128xf32, #tpu.memory_space<vmem>>, vector<1x128xf32>
    %19 = vector.shape_cast %18 : vector<1x128xf32> to vector<1x1x128xf32>
    %20 = vector.broadcast %19 : vector<1x1x128xf32> to vector<2x16x128xf32>
    %21 = arith.mulf %17, %20 : vector<2x16x128xf32>
    %cst_15 = arith.constant dense<0.000000e+00> : vector<2x16xf32>
    %22 = vector.multi_reduction <add>, %21, %cst_15 [2] : vector<2x16x128xf32> to vector<2x16xf32>
    %23 = vector.shape_cast %22 : vector<2x16xf32> to vector<2x16x1xf32>
    %cst_16 = arith.constant dense<0xFF800000> : vector<2x1xf32>
    %24 = vector.multi_reduction <maximumf>, %23, %cst_16 [1] : vector<2x16x1xf32> to vector<2x1xf32>
    %25 = vector.shape_cast %24 : vector<2x1xf32> to vector<2x1x1xf32>
    %26 = vector.broadcast %25 : vector<2x1x1xf32> to vector<2x16x1xf32>
    %27 = arith.subf %23, %26 : vector<2x16x1xf32>
    %28 = math.exp %27 : vector<2x16x1xf32>
    %cst_17 = arith.constant dense<0.000000e+00> : vector<2x1xf32>
    %29 = vector.multi_reduction <add>, %28, %cst_17 [1] : vector<2x16x1xf32> to vector<2x1xf32>
    %30 = vector.shape_cast %29 : vector<2x1xf32> to vector<2x1x1xf32>
    %31 = tpu.reciprocal %30 {approx = true} : vector<2x1x1xf32> -> vector<2x1x1xf32>
    %32 = vector.broadcast %31 : vector<2x1x1xf32> to vector<2x16x1xf32>
    %33 = arith.mulf %28, %32 : vector<2x16x1xf32>
    %34 = vector.broadcast %33 : vector<2x16x1xf32> to vector<2x16x128xf32>
    %35 = arith.mulf %0, %34 : vector<2x16x128xf32>
    %cst_18 = arith.constant dense<0.000000e+00> : vector<2x128xf32>
    %36 = vector.multi_reduction <add>, %35, %cst_18 [1] : vector<2x16x128xf32> to vector<2x128xf32>
    %c0_19 = arith.constant 0 : index
    %c0_20 = arith.constant 0 : index
    %37 = vector.load %arg7[%c0_19, %c0_20] : memref<2x128xf32, #tpu.memory_space<vmem>>, vector<2x128xf32>
    tpu.vector_store %arg7[%c0_19, %c0_20], %36 {strides = array<i32>} : memref<2x128xf32, #tpu.memory_space<vmem>>, vector<2x128xf32>,
    return
  }
  func.func @transform_0(%arg0: i32) -> (i32, i32, i32) {
    %c0_i32 = arith.constant 0 : i32
    %c0_i32_0 = arith.constant 0 : i32
    %c0_i32_1 = arith.constant 0 : i32
    return %arg0, %c0_i32, %c0_i32_0 : i32, i32, i32
  }
  func.func @transform_1(%arg0: i32) -> (i32, i32) {
    %c0_i32 = arith.constant 0 : i32
    %c0_i32_0 = arith.constant 0 : i32
    return %arg0, %c0_i32 : i32, i32
  }
  func.func @transform_2(%arg0: i32) -> (i32, i32) {
    %c0_i32 = arith.constant 0 : i32
    %c0_i32_0 = arith.constant 0 : i32
    %c0_i32_1 = arith.constant 0 : i32
    return %c0_i32, %c0_i32_0 : i32, i32
  }
  func.func @transform_3(%arg0: i32) -> (i32, i32) {
    %c0_i32 = arith.constant 0 : i32
    %c0_i32_0 = arith.constant 0 : i32
    %c0_i32_1 = arith.constant 0 : i32
    return %c0_i32, %c0_i32_0 : i32, i32
  }
  func.func @transform_4(%arg0: i32) -> (i32, i32) {
    %c0_i32 = arith.constant 0 : i32
    %c0_i32_0 = arith.constant 0 : i32
    %c0_i32_1 = arith.constant 0 : i32
    return %c0_i32, %c0_i32_0 : i32, i32
  }
  func.func @transform_5(%arg0: i32) -> (i32, i32) {
    %c0_i32 = arith.constant 0 : i32
    %c0_i32_0 = arith.constant 0 : i32
    %c0_i32_1 = arith.constant 0 : i32
    return %c0_i32, %c0_i32_0 : i32, i32
  }
  func.func @transform_6(%arg0: i32) -> (i32, i32) {
    %c0_i32 = arith.constant 0 : i32
    %c0_i32_0 = arith.constant 0 : i32
    return %arg0, %c0_i32 : i32, i32
  }
}

module attributes {stable_mosaic.version = 11 : i64} {
  func.func @_attention_kernel(%arg0: i32, %arg1: memref<2x16x128xf32, #tpu.memory_space<vmem>>, %arg2: memref<2x128xf32, #tpu.memory_space<vmem>>, %arg3: memref<128x128xf32, #tpu.memory_space<vmem>>, %arg4: memref<1x128xf32, #tpu.memory_space<vmem>>, %arg5: memref<128x128xf32, #tpu.memory_space<vmem>>, %arg6: memref<1x128xf32, #tpu.memory_space<vmem>>, %arg7: memref<2x128xf32, #tpu.memory_space<vmem>>) attributes {dimension_semantics = [#tpu.dimension_semantics<parallel>], iteration_bounds = array<i64: 1>, scalar_prefetch = 0 : i64, scratch_operands = 0 : i64, tpu.core_type = #tpu.core_type<tc>, window_params = [{transform_indices = @transform_0, window_bounds = array<i64: 2, 16, 128>}, {transform_indices = @transform_1, window_bounds = array<i64: 2, 128>}, {pipeline_mode = #tpu.pipeline_mode<synchronous>, transform_indices = @transform_2, window_bounds = array<i64: 128, 128>}, {pipeline_mode = #tpu.pipeline_mode<synchronous>, transform_indices = @transform_3, window_bounds = array<i64: 1, 128>}, {pipeline_mode = #tpu.pipeline_mode<synchronous>, transform_indices = @transform_4, window_bounds = array<i64: 128, 128>}, {pipeline_mode = #tpu.pipeline_mode<synchronous>, transform_indices = @transform_5, window_bounds = array<i64: 1, 128>}, {transform_indices = @transform_6, window_bounds = array<i64: 2, 128>}]} {
    %c0 = arith.constant 0 : index
    %c0_0 = arith.constant 0 : index
    %c0_1 = arith.constant 0 : index
    %0 = vector.load %arg1[%c0, %c0_0, %c0_1] : memref<2x16x128xf32, #tpu.memory_space<vmem>>, vector<2x16x128xf32>
    %1 = vector.shape_cast %0 : vector<2x16x128xf32> to vector<32x128xf32>
    %c0_2 = arith.constant 0 : index
    %c0_3 = arith.constant 0 : index
    %2 = vector.load %arg3[%c0_2, %c0_3] : memref<128x128xf32, #tpu.memory_space<vmem>>, vector<128x128xf32>
    %cst = arith.constant dense<0.000000e+00> : vector<32x128xf32>
    %3 = tpu.matmul %1, %2, %cst {dimension_numbers = #tpu.dot_dimension_numbers<[1], [0], [0], [1], [0, 0, 1, 1], [], []>} : vector<32x128xf32>, vector<128x128xf32>, vector<32x128xf32> -> vector<32x128xf32>
    %c0_4 = arith.constant 0 : index
    %c0_5 = arith.constant 0 : index
    %4 = vector.load %arg4[%c0_4, %c0_5] : memref<1x128xf32, #tpu.memory_space<vmem>>, vector<1x128xf32>
    %5 = vector.broadcast %4 : vector<1x128xf32> to vector<32x128xf32>
    %6 = arith.addf %3, %5 : vector<32x128xf32>
    %cst_6 = arith.constant 0.000000e+00 : f32
    %7 = vector.broadcast %cst_6 : f32 to vector<32x128xf32>
    %8 = arith.maximumf %6, %7 : vector<32x128xf32>
    %c0_7 = arith.constant 0 : index
    %c0_8 = arith.constant 0 : index
    %9 = vector.load %arg5[%c0_7, %c0_8] : memref<128x128xf32, #tpu.memory_space<vmem>>, vector<128x128xf32>
    %cst_9 = arith.constant dense<0.000000e+00> : vector<32x128xf32>
    %10 = tpu.matmul %8, %9, %cst_9 {dimension_numbers = #tpu.dot_dimension_numbers<[1], [0], [0], [1], [0, 0, 1, 1], [], []>} : vector<32x128xf32>, vector<128x128xf32>, vector<32x128xf32> -> vector<32x128xf32>
    %11 = vector.shape_cast %10 : vector<32x128xf32> to vector<2x16x128xf32>
    %c0_10 = arith.constant 0 : index
    %c0_11 = arith.constant 0 : index
    %12 = vector.load %arg2[%c0_10, %c0_11] : memref<2x128xf32, #tpu.memory_space<vmem>>, vector<2x128xf32>
    %13 = vector.shape_cast %12 : vector<2x128xf32> to vector<2x1x128xf32>
    %14 = vector.broadcast %13 : vector<2x1x128xf32> to vector<2x16x128xf32>
    %15 = arith.addf %11, %14 : vector<2x16x128xf32>
    %cst_12 = arith.constant 0.000000e+00 : f32
    %16 = vector.broadcast %cst_12 : f32 to vector<2x16x128xf32>
    %17 = arith.maximumf %15, %16 : vector<2x16x128xf32>
    %c0_13 = arith.constant 0 : index
    %c0_14 = arith.constant 0 : index
    %18 = vector.load %arg6[%c0_13, %c0_14] : memref<1x128xf32, #tpu.memory_space<vmem>>, vector<1x128xf32>
    %19 = vector.shape_cast %18 : vector<1x128xf32> to vector<1x1x128xf32>
    %20 = vector.broadcast %19 : vector<1x1x128xf32> to vector<2x16x128xf32>
    %21 = arith.mulf %17, %20 : vector<2x16x128xf32>
    %cst_15 = arith.constant dense<0.000000e+00> : vector<2x16xf32>
    %22 = vector.multi_reduction <add>, %21, %cst_15 [2] : vector<2x16x128xf32> to vector<2x16xf32>
    %23 = vector.shape_cast %22 : vector<2x16xf32> to vector<2x16x1xf32>
    %cst_16 = arith.constant dense<0xFF800000> : vector<2x1xf32>
    %24 = vector.multi_reduction <maximumf>, %23, %cst_16 [1] : vector<2x16x1xf32> to vector<2x1xf32>
    %25 = vector.shape_cast %24 : vector<2x1xf32> to vector<2x1x1xf32>
    %26 = vector.broadcast %25 : vector<2x1x1xf32> to vector<2x16x1xf32>
    %27 = arith.subf %23, %26 : vector<2x16x1xf32>
    %28 = math.exp %27 : vector<2x16x1xf32>
    %cst_17 = arith.constant dense<0.000000e+00> : vector<2x1xf32>
    %29 = vector.multi_reduction <add>, %28, %cst_17 [1] : vector<2x16x1xf32> to vector<2x1xf32>
    %30 = vector.shape_cast %29 : vector<2x1xf32> to vector<2x1x1xf32>
    %31 = tpu.reciprocal %30 {approx = true} : vector<2x1x1xf32> -> vector<2x1x1xf32>
    %32 = vector.broadcast %31 : vector<2x1x1xf32> to vector<2x16x1xf32>
    %33 = arith.mulf %28, %32 : vector<2x16x1xf32>
    %34 = vector.broadcast %33 : vector<2x16x1xf32> to vector<2x16x128xf32>
    %35 = arith.mulf %0, %34 : vector<2x16x128xf32>
    %cst_18 = arith.constant dense<0.000000e+00> : vector<2x128xf32>
    %36 = vector.multi_reduction <add>, %35, %cst_18 [1] : vector<2x16x128xf32> to vector<2x128xf32>
    %c0_19 = arith.constant 0 : index
    %c0_20 = arith.constant 0 : index
    %37 = vector.load %arg7[%c0_19, %c0_20] : memref<2x128xf32, #tpu.memory_space<vmem>>, vector<2x128xf32>
    tpu.vector_store %arg7[%c0_19, %c0_20], %36 {strides = array<i32>} : memref<2x128xf32, #tpu.memory_space<vmem>>, vector<2x128xf32>,
    return
  }
  func.func @transform_0(%arg0: i32) -> (i32, i32, i32) {
    %c0_i32 = arith.constant 0 : i32
    %c0_i32_0 = arith.constant 0 : i32
    %c0_i32_1 = arith.constant 0 : i32
    return %arg0, %c0_i32, %c0_i32_0 : i32, i32, i32
  }
  func.func @transform_1(%arg0: i32) -> (i32, i32) {
    %c0_i32 = arith.constant 0 : i32
    %c0_i32_0 = arith.constant 0 : i32
    return %arg0, %c0_i32 : i32, i32
  }
  func.func @transform_2(%arg0: i32) -> (i32, i32) {
    %c0_i32 = arith.constant 0 : i32
    %c0_i32_0 = arith.constant 0 : i32
    %c0_i32_1 = arith.constant 0 : i32
    return %c0_i32, %c0_i32_0 : i32, i32
  }
  func.func @transform_3(%arg0: i32) -> (i32, i32) {
    %c0_i32 = arith.constant 0 : i32
    %c0_i32_0 = arith.constant 0 : i32
    %c0_i32_1 = arith.constant 0 : i32
    return %c0_i32, %c0_i32_0 : i32, i32
  }
  func.func @transform_4(%arg0: i32) -> (i32, i32) {
    %c0_i32 = arith.constant 0 : i32
    %c0_i32_0 = arith.constant 0 : i32
    %c0_i32_1 = arith.constant 0 : i32
    return %c0_i32, %c0_i32_0 : i32, i32
  }
  func.func @transform_5(%arg0: i32) -> (i32, i32) {
    %c0_i32 = arith.constant 0 : i32
    %c0_i32_0 = arith.constant 0 : i32
    %c0_i32_1 = arith.constant 0 : i32
    return %c0_i32, %c0_i32_0 : i32, i32
  }
  func.func @transform_6(%arg0: i32) -> (i32, i32) {
    %c0_i32 = arith.constant 0 : i32
    %c0_i32_0 = arith.constant 0 : i32
    return %arg0, %c0_i32 : i32, i32
  }
}

</mosaic_0001>

<llo_original>
// kernel: tpu_custom_call.1
$region0: #{tpu_custom_call.1}
  #allocation0 [shape = 'u32[]', space=smem, size = 0x4, offset = 0x4, fixed_abs, tag = 'smem constant byte address 0x4 - core index']
  #allocation1 [shape = 'u32[144,128]{1,0:T(1,128)}', space=vmem, size = 0x12000, scoped, tag = 'internal scratch']
  %s0 = inlined_call_operand.hbm [shape: f32[2,16,128], index: 0, kind: input, shape index: {}]
  %s1 = inlined_call_operand.vmem [shape: f32[2,128], index: 1, kind: input, shape index: {}]
  %s2 = inlined_call_operand.hbm [shape: f32[128,128], index: 2, kind: input, shape index: {}]
  %s3 = inlined_call_operand.vmem [shape: f32[1,128], index: 3, kind: input, shape index: {}]
  %s4 = inlined_call_operand.hbm [shape: f32[128,128], index: 4, kind: input, shape index: {}]
  %s5 = inlined_call_operand.vmem [shape: f32[1,128], index: 5, kind: input, shape index: {}]
  %s6 = inlined_call_operand.hbm [shape: f32[2,128], index: 6, kind: output, shape index: {}]
  %s7 = sld [smem:[#allocation0]]
  $region46: #{tpu_custom_call.1} parent=0
    _
  %s9 = ssub.s32 1, %s7
  %s10 = scalar_select 0, %s9, %s7
  $region1: #{tpu_custom_call.1} parent=0
    #allocation2 [shape = 'u8[16384]{0}', space=vmem, size = 0x4000, scoped, tag = 'input window, operand 0, single buffered']
    #allocation3 [shape = 's32[1]{0}', space=sflag, size = 0x4, scoped, tag = 'scoped memory for tpu_custom_call.1']
    #allocation4 [shape = 's32[1]{0}', space=sflag, size = 0x4, scoped, tag = 'scoped memory for tpu_custom_call.1']
    #allocation5 [shape = 'u8[65536]{0}', space=vmem, size = 0x10000, scoped, tag = 'input window, operand 2, single buffered']
    #allocation6 [shape = 's32[1]{0}', space=sflag, size = 0x4, scoped, tag = 'scoped memory for tpu_custom_call.1']
    #allocation7 [shape = 'u8[65536]{0}', space=vmem, size = 0x10000, scoped, tag = 'input window, operand 4, single buffered']
    #allocation8 [shape = 'u8[1024]{0}', space=vmem, size = 0x400, scoped, tag = 'output window, operand 0, single buffered']
    %11 = vsyncpa [#allocation3], 0
    %12 = vsyncpa [#allocation6], 0
    %13 = vsyncpa [#allocation4], 0
    // Predicated region
    $region2: #{tpu_custom_call.1} parent=1 // pred_check
      _
    $region3: #{tpu_custom_call.1} parent=1 // pred_check_branch
      %15 = sbr.rel (0) target = $region5
    $region4: #{tpu_custom_call.1} parent=1 // pred_region
      %s17 = ssub.s32 512, 512
      %18 = vsyncadd [#allocation3], %s17
      %s19 = sshll.u32 [#allocation2], 4
      %s20 = int_to_ptr.vmem [resolvable:$true] %s19
      %25 = dma.hbm_to_vmem [thread:$0]  %s0, 512, %s20, [#allocation3], 128, 128, 8
    $region5: #{tpu_custom_call.1} parent=1 // pred_fallthru
      _
    // Predicated region
    $region6: #{tpu_custom_call.1} parent=1 // pred_check
      _
    $region7: #{tpu_custom_call.1} parent=1 // pred_check_branch
      %27 = sbr.rel (0) target = $region9
    $region8: #{tpu_custom_call.1} parent=1 // pred_region
      _
    $region9: #{tpu_custom_call.1} parent=1 // pred_fallthru
      _
    // Predicated region
    $region10: #{tpu_custom_call.1} parent=1 // pred_check
      _
    $region11: #{tpu_custom_call.1} parent=1 // pred_check_branch
      %29 = sbr.rel (0) target = $region13
    $region12: #{tpu_custom_call.1} parent=1 // pred_region
      %s31 = ssub.s32 2048, 2048
      %32 = vsyncadd [#allocation6], %s31
      %s33 = sshll.u32 [#allocation5], 4
      %s34 = int_to_ptr.vmem [resolvable:$true] %s33
      %39 = dma.hbm_to_vmem [thread:$0]  %s2, 2048, %s34, [#allocation6], 128, 128, 8
    $region13: #{tpu_custom_call.1} parent=1 // pred_fallthru
      _
    // Predicated region
    $region14: #{tpu_custom_call.1} parent=1 // pred_check
      _
    $region15: #{tpu_custom_call.1} parent=1 // pred_check_branch
      %41 = sbr.rel (0) target = $region17
    $region16: #{tpu_custom_call.1} parent=1 // pred_region
      _
    $region17: #{tpu_custom_call.1} parent=1 // pred_fallthru
      _
    // Predicated region
    $region18: #{tpu_custom_call.1} parent=1 // pred_check
      _
    $region19: #{tpu_custom_call.1} parent=1 // pred_check_branch
      %43 = sbr.rel (0) target = $region21
    $region20: #{tpu_custom_call.1} parent=1 // pred_region
      %s45 = ssub.s32 2048, 2048
      %46 = vsyncadd [#allocation6], %s45
      %s47 = sshll.u32 [#allocation7], 4
      %s48 = int_to_ptr.vmem [resolvable:$true] %s47
      %53 = dma.hbm_to_vmem [thread:$0]  %s4, 2048, %s48, [#allocation6], 128, 128, 8
    $region21: #{tpu_custom_call.1} parent=1 // pred_fallthru
      _
    // Predicated region
    $region22: #{tpu_custom_call.1} parent=1 // pred_check
      _
    $region23: #{tpu_custom_call.1} parent=1 // pred_check_branch
      %55 = sbr.rel (0) target = $region25
    $region24: #{tpu_custom_call.1} parent=1 // pred_region
      _
    $region25: #{tpu_custom_call.1} parent=1 // pred_fallthru
      _
    // Predicated region
    $region26: #{tpu_custom_call.1} parent=1 // pred_check
      _
    $region27: #{tpu_custom_call.1} parent=1 // pred_check_branch
      %57 = sbr.rel (0) target = $region29
    $region28: #{tpu_custom_call.1} parent=1 // pred_region
      %58 = dma.done [#allocation3], 512
    $region29: #{tpu_custom_call.1} parent=1 // pred_fallthru
      _
    // Predicated region
    $region30: #{tpu_custom_call.1} parent=1 // pred_check
      _
    $region31: #{tpu_custom_call.1} parent=1 // pred_check_branch
      %60 = sbr.rel (0) target = $region33
    $region32: #{tpu_custom_call.1} parent=1 // pred_region
      %61 = dma.done [#allocation6], 2048
    $region33: #{tpu_custom_call.1} parent=1 // pred_fallthru
      _
    // Predicated region
    $region34: #{tpu_custom_call.1} parent=1 // pred_check
      _
    $region35: #{tpu_custom_call.1} parent=1 // pred_check_branch
      %63 = sbr.rel (0) target = $region37
    $region36: #{tpu_custom_call.1} parent=1 // pred_region
      %64 = dma.done [#allocation6], 2048
    $region37: #{tpu_custom_call.1} parent=1 // pred_fallthru
      _
    %v65 = vld [vmem:[#allocation2] sm:$0xff]
    %v66 = vld [vmem:[#allocation2 + $0x8] sm:$0xff]
    %v67 = vld [vmem:[#allocation2 + $0x10] sm:$0xff]
    %v68 = vld [vmem:[#allocation2 + $0x18] sm:$0xff]
    %v69 = vld [vmem:[#allocation5] sm:$0xff]
    %v70 = vld [vmem:[#allocation5 + $0x8] sm:$0xff]
    %v71 = vld [vmem:[#allocation5 + $0x10] sm:$0xff]
    %v72 = vld [vmem:[#allocation5 + $0x18] sm:$0xff]
    %v73 = vld [vmem:[#allocation5 + $0x20] sm:$0xff]
    %v74 = vld [vmem:[#allocation5 + $0x28] sm:$0xff]
    %v75 = vld [vmem:[#allocation5 + $0x30] sm:$0xff]
    %v76 = vld [vmem:[#allocation5 + $0x38] sm:$0xff]
    %v77 = vld [vmem:[#allocation5 + $0x40] sm:$0xff]
    %v78 = vld [vmem:[#allocation5 + $0x48] sm:$0xff]
    %v79 = vld [vmem:[#allocation5 + $0x50] sm:$0xff]
    %v80 = vld [vmem:[#allocation5 + $0x58] sm:$0xff]
    %v81 = vld [vmem:[#allocation5 + $0x60] sm:$0xff]
    %v82 = vld [vmem:[#allocation5 + $0x68] sm:$0xff]
    %v83 = vld [vmem:[#allocation5 + $0x70] sm:$0xff]
    %v84 = vld [vmem:[#allocation5 + $0x78] sm:$0xff]
    %v85 = vld [vmem:[%s3] sm:$0x1]
    %v87 = vlaneseq
    %v88 = vshrl.u32 %v87, 7
    %v89 = vsub.s32 0, %v88
    %v90 = vrot.slane %v85, %v89
    %92 = vmatprep.subr.mxu0 0.0
    %93 = vmatpush1.msra.mxu0 %v69
    %94 = vmatprep.subr.mxu0 0.0
    %95 = vmatpush1.msra.mxu0 %v70
    %96 = vmatprep.subr.mxu0 0.0
    %97 = vmatpush1.msra.mxu0 %v71
    %98 = vmatprep.subr.mxu0 0.0
    %99 = vmatpush1.msra.mxu0 %v72
    %100 = vmatprep.subr.mxu0 0.0
    %101 = vmatpush1.msra.mxu0 %v73
    %102 = vmatprep.subr.mxu0 0.0
    %103 = vmatpush1.msra.mxu0 %v74
    %104 = vmatprep.subr.mxu0 0.0
    %105 = vmatpush1.msra.mxu0 %v75
    %106 = vmatprep.subr.mxu0 0.0
    %107 = vmatpush1.msra.mxu0 %v76
    %108 = vmatprep.subr.mxu0 0.0
    %109 = vmatpush1.msra.mxu0 %v77
    %110 = vmatprep.subr.mxu0 0.0
    %111 = vmatpush1.msra.mxu0 %v78
    %112 = vmatprep.subr.mxu0 0.0
    %113 = vmatpush1.msra.mxu0 %v79
    %114 = vmatprep.subr.mxu0 0.0
    %115 = vmatpush1.msra.mxu0 %v80
    %116 = vmatprep.subr.mxu0 0.0
    %117 = vmatpush1.msra.mxu0 %v81
    %118 = vmatprep.subr.mxu0 0.0
    %119 = vmatpush1.msra.mxu0 %v82
    %120 = vmatprep.subr.mxu0 0.0
    %121 = vmatpush1.msra.mxu0 %v83
    %122 = vmatprep.subr.mxu0 0.0
    %123 = vmatpush1.msra.mxu0 %v84
    %124 = vmatprep.subr.mxu0 0.0
    %125 = vmatpush1.msra.mxu0 0.0
    %126 = vmatprep.subr.mxu0 0.0
    %127 = vmatpush1.msra.mxu0 0.0
    %128 = vmatprep.subr.mxu0 0.0
    %129 = vmatpush1.msra.mxu0 0.0
    %130 = vmatprep.subr.mxu0 0.0
    %131 = vmatpush1.msra.mxu0 0.0
    %132 = vmatprep.subr.mxu0 0.0
    %133 = vmatpush1.msra.mxu0 0.0
    %134 = vmatprep.subr.mxu0 0.0
    %135 = vmatpush1.msra.mxu0 0.0
    %136 = vmatprep.subr.mxu0 0.0
    %137 = vmatpush1.msra.mxu0 0.0
    %138 = vmatprep.subr.mxu0 0.0
    %139 = vmatpush1.msra.mxu0 0.0
    %140 = vmatprep.subr.mxu0 0.0
    %141 = vmatpush1.msra.mxu0 0.0
    %142 = vmatprep.subr.mxu0 0.0
    %143 = vmatpush1.msra.mxu0 0.0
    %144 = vmatprep.subr.mxu0 0.0
    %145 = vmatpush1.msra.mxu0 0.0
    %146 = vmatprep.subr.mxu0 0.0
    %147 = vmatpush1.msra.mxu0 0.0
    %148 = vmatprep.subr.mxu0 0.0
    %149 = vmatpush1.msra.mxu0 0.0
    %150 = vmatprep.subr.mxu0 0.0
    %151 = vmatpush1.msra.mxu0 0.0
    %152 = vmatprep.subr.mxu0 0.0
    %153 = vmatpush1.msra.mxu0 0.0
    %154 = vmatprep.subr.mxu0 0.0
    %155 = vmatpush1.msra.mxu0 0.0
    %156 = vmatprep.mubr.f32.mxu0 0.0
    %157 = vmatmul.mubr.f32.gmra.mrb[0].mxu0 %v65
    %v158 = vpop.f32.mrb[0].mxu0
    %v159 = vadd.f32 %v90, %v158
    %v160 = vpop.f32.mrb[0].mxu0
    %161 = vmatprep.mubr.f32.mxu0 0.0
    %162 = vmatmul.mubr.f32.gmra.mrb[0].mxu0 %v66
    %v163 = vpop.f32.mrb[0].mxu0
    %v164 = vadd.f32 %v90, %v163
    %v165 = vpop.f32.mrb[0].mxu0
    %166 = vmatprep.mubr.f32.mxu0 0.0
    %167 = vmatmul.mubr.f32.gmra.mrb[0].mxu0 %v67
    %v168 = vpop.f32.mrb[0].mxu0
    %v169 = vadd.f32 %v90, %v168
    %v170 = vpop.f32.mrb[0].mxu0
    %171 = vmatprep.mubr.f32.mxu0 0.0
    %172 = vmatmul.mubr.f32.gmra.mrb[0].mxu0 %v68
    %v173 = vpop.f32.mrb[0].mxu0
    %v174 = vadd.f32 %v90, %v173
    %v175 = vpop.f32.mrb[0].mxu0
    %176 = vdwg.mxu0
    %v177 = vmax.f32 %v159, 0.0
    %v178 = vmax.f32 %v164, 0.0
    %v179 = vmax.f32 %v169, 0.0
    %v180 = vmax.f32 %v174, 0.0
    %v181 = vld [vmem:[#allocation7] sm:$0xff]
    %v182 = vld [vmem:[#allocation7 + $0x8] sm:$0xff]
    %v183 = vld [vmem:[#allocation7 + $0x10] sm:$0xff]
    %v184 = vld [vmem:[#allocation7 + $0x18] sm:$0xff]
    %v185 = vld [vmem:[#allocation7 + $0x20] sm:$0xff]
    %v186 = vld [vmem:[#allocation7 + $0x28] sm:$0xff]
    %v187 = vld [vmem:[#allocation7 + $0x30] sm:$0xff]
    %v188 = vld [vmem:[#allocation7 + $0x38] sm:$0xff]
    %v189 = vld [vmem:[#allocation7 + $0x40] sm:$0xff]
    %v190 = vld [vmem:[#allocation7 + $0x48] sm:$0xff]
    %v191 = vld [vmem:[#allocation7 + $0x50] sm:$0xff]
    %v192 = vld [vmem:[#allocation7 + $0x58] sm:$0xff]
    %v193 = vld [vmem:[#allocation7 + $0x60] sm:$0xff]
    %v194 = vld [vmem:[#allocation7 + $0x68] sm:$0xff]
    %v195 = vld [vmem:[#allocation7 + $0x70] sm:$0xff]
    %v196 = vld [vmem:[#allocation7 + $0x78] sm:$0xff]
    %197 = vmatprep.subr.mxu0 0.0
    %198 = vmatpush1.msra.mxu0 %v181
    %199 = vmatprep.subr.mxu0 0.0
    %200 = vmatpush1.msra.mxu0 %v182
    %201 = vmatprep.subr.mxu0 0.0
    %202 = vmatpush1.msra.mxu0 %v183
    %203 = vmatprep.subr.mxu0 0.0
    %204 = vmatpush1.msra.mxu0 %v184
    %205 = vmatprep.subr.mxu0 0.0
    %206 = vmatpush1.msra.mxu0 %v185
    %207 = vmatprep.subr.mxu0 0.0
    %208 = vmatpush1.msra.mxu0 %v186
    %209 = vmatprep.subr.mxu0 0.0
    %210 = vmatpush1.msra.mxu0 %v187
    %211 = vmatprep.subr.mxu0 0.0
    %212 = vmatpush1.msra.mxu0 %v188
    %213 = vmatprep.subr.mxu0 0.0
    %214 = vmatpush1.msra.mxu0 %v189
    %215 = vmatprep.subr.mxu0 0.0
    %216 = vmatpush1.msra.mxu0 %v190
    %217 = vmatprep.subr.mxu0 0.0
    %218 = vmatpush1.msra.mxu0 %v191
    %219 = vmatprep.subr.mxu0 0.0
    %220 = vmatpush1.msra.mxu0 %v192
    %221 = vmatprep.subr.mxu0 0.0
    %222 = vmatpush1.msra.mxu0 %v193
    %223 = vmatprep.subr.mxu0 0.0
    %224 = vmatpush1.msra.mxu0 %v194
    %225 = vmatprep.subr.mxu0 0.0
    %226 = vmatpush1.msra.mxu0 %v195
    %227 = vmatprep.subr.mxu0 0.0
    %228 = vmatpush1.msra.mxu0 %v196
    %229 = vmatprep.subr.mxu0 0.0
    %230 = vmatpush1.msra.mxu0 0.0
    %231 = vmatprep.subr.mxu0 0.0
    %232 = vmatpush1.msra.mxu0 0.0
    %233 = vmatprep.subr.mxu0 0.0
    %234 = vmatpush1.msra.mxu0 0.0
    %235 = vmatprep.subr.mxu0 0.0
    %236 = vmatpush1.msra.mxu0 0.0
    %237 = vmatprep.subr.mxu0 0.0
    %238 = vmatpush1.msra.mxu0 0.0
    %239 = vmatprep.subr.mxu0 0.0
    %240 = vmatpush1.msra.mxu0 0.0
    %241 = vmatprep.subr.mxu0 0.0
    %242 = vmatpush1.msra.mxu0 0.0
    %243 = vmatprep.subr.mxu0 0.0
    %244 = vmatpush1.msra.mxu0 0.0
    %245 = vmatprep.subr.mxu0 0.0
    %246 = vmatpush1.msra.mxu0 0.0
    %247 = vmatprep.subr.mxu0 0.0
    %248 = vmatpush1.msra.mxu0 0.0
    %249 = vmatprep.subr.mxu0 0.0
    %250 = vmatpush1.msra.mxu0 0.0
    %251 = vmatprep.subr.mxu0 0.0
    %252 = vmatpush1.msra.mxu0 0.0
    %253 = vmatprep.subr.mxu0 0.0
    %254 = vmatpush1.msra.mxu0 0.0
    %255 = vmatprep.subr.mxu0 0.0
    %256 = vmatpush1.msra.mxu0 0.0
    %257 = vmatprep.subr.mxu0 0.0
    %258 = vmatpush1.msra.mxu0 0.0
    %259 = vmatprep.subr.mxu0 0.0
    %260 = vmatpush1.msra.mxu0 0.0
    %261 = vmatprep.mubr.f32.mxu0 0.0
    %262 = vmatmul.mubr.f32.gmra.mrb[0].mxu0 %v177
    %v263 = vpop.f32.mrb[0].mxu0
    %v264 = vadd.f32 0.0, %v263
    %v265 = vpop.f32.mrb[0].mxu0
    %266 = vmatprep.mubr.f32.mxu0 0.0
    %267 = vmatmul.mubr.f32.gmra.mrb[0].mxu0 %v178
    %v268 = vpop.f32.mrb[0].mxu0
    %v269 = vadd.f32 0.0, %v268
    %v270 = vpop.f32.mrb[0].mxu0
    %271 = vmatprep.mubr.f32.mxu0 0.0
    %272 = vmatmul.mubr.f32.gmra.mrb[0].mxu0 %v179
    %v273 = vpop.f32.mrb[0].mxu0
    %v274 = vadd.f32 0.0, %v273
    %v275 = vpop.f32.mrb[0].mxu0
    %276 = vmatprep.mubr.f32.mxu0 0.0
    %277 = vmatmul.mubr.f32.gmra.mrb[0].mxu0 %v180
    %v278 = vpop.f32.mrb[0].mxu0
    %v279 = vadd.f32 0.0, %v278
    %v280 = vpop.f32.mrb[0].mxu0
    %281 = vdwg.mxu0
    %v282 = vld [vmem:[%s1] sm:$0x3]
    %v285 = vunpack.c.l.s4 1966171168
    %v286 = vunpack.c.0.s8 %v285
    %v287 = vlaneseq
    %v288 = vshrl.u32 %v287, 7
    %v289 = vsub.s32 %v286, %v288
    %v290 = vrot.slane %v282, %v289
    %v291 = vcombine.high %v290, %v290
    %v293 = vunpack.c.l.s4 1966171168
    %v294 = vunpack.c.0.s8 %v293
    %v295 = vlaneseq
    %v296 = vshrl.u32 %v295, 7
    %v297 = vsub.s32 %v294, %v296
    %v298 = vrot.slane %v290, %v297
    %v300 = vunpack.c.l.s4 1966171168
    %v301 = vunpack.c.0.s8 %v300
    %v302 = vlaneseq
    %v303 = vshrl.u32 %v302, 7
    %v304 = vsub.s32 %v301, %v303
    %v305 = vrot.slane %v291, %v304
    %v306 = vlaneseq
    %v307 = vshrl.u32 %v306, 7
    %v308 = vsub.s32 0, %v307
    %v309 = vrot.slane %v298, %v308
    %v310 = vlaneseq
    %v311 = vshrl.u32 %v310, 7
    %v312 = vsub.s32 0, %v311
    %v313 = vrot.slane %v305, %v312
    %v316 = vadd.f32 %v264, %v309
    %v317 = vadd.f32 %v269, %v309
    %v318 = vadd.f32 %v274, %v313
    %v319 = vadd.f32 %v279, %v313
    %v320 = vmax.f32 %v316, 0.0
    %v321 = vmax.f32 %v317, 0.0
    %v322 = vmax.f32 %v318, 0.0
    %v323 = vmax.f32 %v319, 0.0
    %v324 = vld [vmem:[%s5] sm:$0x1]
    %v326 = vlaneseq
    %v327 = vshrl.u32 %v326, 7
    %v328 = vsub.s32 0, %v327
    %v329 = vrot.slane %v324, %v328
    %v331 = vmul.f32 %v320, %v329
    %v332 = vmul.f32 %v321, %v329
    %v333 = vmul.f32 %v322, %v329
    %v334 = vmul.f32 %v323, %v329
    %335 = vadd.xlane.f32.xlu0 %v331
    %v336 = vpop.xlane.xlu0 %335
    %337 = vadd.xlane.f32.xlu0 %v332
    %v338 = vpop.xlane.xlu0 %337
    %339 = vadd.xlane.f32.xlu0 %v333
    %v340 = vpop.xlane.xlu0 %339
    %341 = vadd.xlane.f32.xlu0 %v334
    %v342 = vpop.xlane.xlu0 %341
    %v343 = vmax.f32 %v336, %v338
    %v344 = vrot.slane %v343, 4
    %v345 = vmax.f32 %v343, %v344
    %v346 = vrot.slane %v345, 2
    %v347 = vmax.f32 %v345, %v346
    %v348 = vrot.slane %v347, 1
    %v349 = vmax.f32 %v347, %v348
    %v350 = vmax.f32 %v340, %v342
    %v351 = vrot.slane %v350, 4
    %v352 = vmax.f32 %v350, %v351
    %v353 = vrot.slane %v352, 2
    %v354 = vmax.f32 %v352, %v353
    %v355 = vrot.slane %v354, 1
    %v356 = vmax.f32 %v354, %v355
    %v357 = vsub.f32 %v336, %v349
    %v358 = vsub.f32 %v338, %v349
    %v359 = vsub.f32 %v340, %v356
    %v360 = vsub.f32 %v342, %v356
    %v361 = vmul.f32 %v357, 1.442695
    %v362 = vpow.pop %v361
    %v363 = vmul.f32 %v358, 1.442695
    %v364 = vpow.pop %v363
    %v365 = vmul.f32 %v359, 1.442695
    %v366 = vpow.pop %v365
    %v367 = vmul.f32 %v360, 1.442695
    %v368 = vpow.pop %v367
    %v369 = vadd.f32 %v362, %v364
    %v370 = vrot.slane %v369, 4
    %v371 = vadd.f32 %v369, %v370
    %v372 = vrot.slane %v371, 2
    %v373 = vadd.f32 %v371, %v372
    %v374 = vrot.slane %v373, 1
    %v375 = vadd.f32 %v373, %v374
    %v376 = vadd.f32 %v366, %v368
    %v377 = vrot.slane %v376, 4
    %v378 = vadd.f32 %v376, %v377
    %v379 = vrot.slane %v378, 2
    %v380 = vadd.f32 %v378, %v379
    %v381 = vrot.slane %v380, 1
    %v382 = vadd.f32 %v380, %v381
    %v383 = vrcp.pop %v375
    %v384 = vrcp.pop %v382
    %v385 = vmul.f32 %v362, %v383
    %v386 = vmul.f32 %v364, %v383
    %v387 = vmul.f32 %v366, %v384
    %v388 = vmul.f32 %v368, %v384
    %v389 = vmul.f32 %v65, %v385
    %v390 = vmul.f32 %v66, %v386
    %v391 = vmul.f32 %v67, %v387
    %v392 = vmul.f32 %v68, %v388
    %v393 = vadd.f32 %v389, %v390
    %v394 = vrot.slane %v393, 4
    %v395 = vadd.f32 %v393, %v394
    %v396 = vrot.slane %v395, 2
    %v397 = vadd.f32 %v395, %v396
    %v398 = vrot.slane %v397, 1
    %v399 = vadd.f32 %v397, %v398
    %v400 = vadd.f32 %v391, %v392
    %v401 = vrot.slane %v400, 4
    %v402 = vadd.f32 %v400, %v401
    %v403 = vrot.slane %v402, 2
    %v404 = vadd.f32 %v402, %v403
    %v405 = vrot.slane %v404, 1
    %v406 = vadd.f32 %v404, %v405
    %vm409 = vcmask 1041409
    %v410 = vsel %vm409, %v406, %v399
    %412 = vst [vmem:[#allocation8] sm:$0x3] %v410
    // Predicated region
    $region38: #{tpu_custom_call.1} parent=1 // pred_check
      _
    $region39: #{tpu_custom_call.1} parent=1 // pred_check_branch
      %414 = sbr.rel (0) target = $region41
    $region40: #{tpu_custom_call.1} parent=1 // pred_region
      %s416 = ssub.s32 32, 32
      %417 = vsyncadd [#allocation4], %s416
      %s419 = sshll.u32 [#allocation8], 4
      %s420 = int_to_ptr.vmem [resolvable:$true] %s419
      %422 = dma.vmem_to_hbm [thread:$0]  %s420, 32, %s6, [#allocation4]
    $region41: #{tpu_custom_call.1} parent=1 // pred_fallthru
      _
    // Predicated region
    $region42: #{tpu_custom_call.1} parent=1 // pred_check
      _
    $region43: #{tpu_custom_call.1} parent=1 // pred_check_branch
      %424 = sbr.rel (0) target = $region45
    $region44: #{tpu_custom_call.1} parent=1 // pred_region
      %425 = dma.done [#allocation4], 32
    $region45: #{tpu_custom_call.1} parent=1 // pred_fallthru
      _
    %426 = vsyncpa [#allocation3], 1
    %427 = vsyncpa [#allocation6], 1
    %428 = vsyncpa [#allocation4], 1

// kernel: tpu_custom_call.1
$region0: #{tpu_custom_call.1}
  #allocation0 [shape = 'u32[]', space=smem, size = 0x4, offset = 0x4, fixed_abs, tag = 'smem constant byte address 0x4 - core index']
  #allocation1 [shape = 'u32[144,128]{1,0:T(1,128)}', space=vmem, size = 0x12000, scoped, tag = 'internal scratch']
  %s0 = inlined_call_operand.hbm [shape: f32[2,16,128], index: 0, kind: input, shape index: {}]
  %s1 = inlined_call_operand.vmem [shape: f32[2,128], index: 1, kind: input, shape index: {}]
  %s2 = inlined_call_operand.hbm [shape: f32[128,128], index: 2, kind: input, shape index: {}]
  %s3 = inlined_call_operand.vmem [shape: f32[1,128], index: 3, kind: input, shape index: {}]
  %s4 = inlined_call_operand.hbm [shape: f32[128,128], index: 4, kind: input, shape index: {}]
  %s5 = inlined_call_operand.vmem [shape: f32[1,128], index: 5, kind: input, shape index: {}]
  %s6 = inlined_call_operand.hbm [shape: f32[2,128], index: 6, kind: output, shape index: {}]
  %s7 = sld [smem:[#allocation0]]
  $region46: #{tpu_custom_call.1} parent=0
    _
  %s9 = ssub.s32 1, %s7
  %s10 = scalar_select 0, %s9, %s7
  $region1: #{tpu_custom_call.1} parent=0
    #allocation2 [shape = 'u8[16384]{0}', space=vmem, size = 0x4000, scoped, tag = 'input window, operand 0, single buffered']
    #allocation3 [shape = 's32[1]{0}', space=sflag, size = 0x4, scoped, tag = 'scoped memory for tpu_custom_call.1']
    #allocation4 [shape = 's32[1]{0}', space=sflag, size = 0x4, scoped, tag = 'scoped memory for tpu_custom_call.1']
    #allocation5 [shape = 'u8[65536]{0}', space=vmem, size = 0x10000, scoped, tag = 'input window, operand 2, single buffered']
    #allocation6 [shape = 's32[1]{0}', space=sflag, size = 0x4, scoped, tag = 'scoped memory for tpu_custom_call.1']
    #allocation7 [shape = 'u8[65536]{0}', space=vmem, size = 0x10000, scoped, tag = 'input window, operand 4, single buffered']
    #allocation8 [shape = 'u8[1024]{0}', space=vmem, size = 0x400, scoped, tag = 'output window, operand 0, single buffered']
    %11 = vsyncpa [#allocation3], 0
    %12 = vsyncpa [#allocation6], 0
    %13 = vsyncpa [#allocation4], 0
    // Predicated region
    $region2: #{tpu_custom_call.1} parent=1 // pred_check
      _
    $region3: #{tpu_custom_call.1} parent=1 // pred_check_branch
      %15 = sbr.rel (0) target = $region5
    $region4: #{tpu_custom_call.1} parent=1 // pred_region
      %s17 = ssub.s32 512, 512
      %18 = vsyncadd [#allocation3], %s17
      %s19 = sshll.u32 [#allocation2], 4
      %s20 = int_to_ptr.vmem [resolvable:$true] %s19
      %25 = dma.hbm_to_vmem [thread:$0]  %s0, 512, %s20, [#allocation3], 128, 128, 8
    $region5: #{tpu_custom_call.1} parent=1 // pred_fallthru
      _
    // Predicated region
    $region6: #{tpu_custom_call.1} parent=1 // pred_check
      _
    $region7: #{tpu_custom_call.1} parent=1 // pred_check_branch
      %27 = sbr.rel (0) target = $region9
    $region8: #{tpu_custom_call.1} parent=1 // pred_region
      _
    $region9: #{tpu_custom_call.1} parent=1 // pred_fallthru
      _
    // Predicated region
    $region10: #{tpu_custom_call.1} parent=1 // pred_check
      _
    $region11: #{tpu_custom_call.1} parent=1 // pred_check_branch
      %29 = sbr.rel (0) target = $region13
    $region12: #{tpu_custom_call.1} parent=1 // pred_region
      %s31 = ssub.s32 2048, 2048
      %32 = vsyncadd [#allocation6], %s31
      %s33 = sshll.u32 [#allocation5], 4
      %s34 = int_to_ptr.vmem [resolvable:$true] %s33
      %39 = dma.hbm_to_vmem [thread:$0]  %s2, 2048, %s34, [#allocation6], 128, 128, 8
    $region13: #{tpu_custom_call.1} parent=1 // pred_fallthru
      _
    // Predicated region
    $region14: #{tpu_custom_call.1} parent=1 // pred_check
      _
    $region15: #{tpu_custom_call.1} parent=1 // pred_check_branch
      %41 = sbr.rel (0) target = $region17
    $region16: #{tpu_custom_call.1} parent=1 // pred_region
      _
    $region17: #{tpu_custom_call.1} parent=1 // pred_fallthru
      _
    // Predicated region
    $region18: #{tpu_custom_call.1} parent=1 // pred_check
      _
    $region19: #{tpu_custom_call.1} parent=1 // pred_check_branch
      %43 = sbr.rel (0) target = $region21
    $region20: #{tpu_custom_call.1} parent=1 // pred_region
      %s45 = ssub.s32 2048, 2048
      %46 = vsyncadd [#allocation6], %s45
      %s47 = sshll.u32 [#allocation7], 4
      %s48 = int_to_ptr.vmem [resolvable:$true] %s47
      %53 = dma.hbm_to_vmem [thread:$0]  %s4, 2048, %s48, [#allocation6], 128, 128, 8
    $region21: #{tpu_custom_call.1} parent=1 // pred_fallthru
      _
    // Predicated region
    $region22: #{tpu_custom_call.1} parent=1 // pred_check
      _
    $region23: #{tpu_custom_call.1} parent=1 // pred_check_branch
      %55 = sbr.rel (0) target = $region25
    $region24: #{tpu_custom_call.1} parent=1 // pred_region
      _
    $region25: #{tpu_custom_call.1} parent=1 // pred_fallthru
      _
    // Predicated region
    $region26: #{tpu_custom_call.1} parent=1 // pred_check
      _
    $region27: #{tpu_custom_call.1} parent=1 // pred_check_branch
      %57 = sbr.rel (0) target = $region29
    $region28: #{tpu_custom_call.1} parent=1 // pred_region
      %58 = dma.done [#allocation3], 512
    $region29: #{tpu_custom_call.1} parent=1 // pred_fallthru
      _
    // Predicated region
    $region30: #{tpu_custom_call.1} parent=1 // pred_check
      _
    $region31: #{tpu_custom_call.1} parent=1 // pred_check_branch
      %60 = sbr.rel (0) target = $region33
    $region32: #{tpu_custom_call.1} parent=1 // pred_region
      %61 = dma.done [#allocation6], 2048
    $region33: #{tpu_custom_call.1} parent=1 // pred_fallthru
      _
    // Predicated region
    $region34: #{tpu_custom_call.1} parent=1 // pred_check
      _
    $region35: #{tpu_custom_call.1} parent=1 // pred_check_branch
      %63 = sbr.rel (0) target = $region37
    $region36: #{tpu_custom_call.1} parent=1 // pred_region
      %64 = dma.done [#allocation6], 2048
    $region37: #{tpu_custom_call.1} parent=1 // pred_fallthru
      _
    %v65 = vld [vmem:[#allocation2] sm:$0xff]
    %v66 = vld [vmem:[#allocation2 + $0x8] sm:$0xff]
    %v67 = vld [vmem:[#allocation2 + $0x10] sm:$0xff]
    %v68 = vld [vmem:[#allocation2 + $0x18] sm:$0xff]
    %v69 = vld [vmem:[#allocation5] sm:$0xff]
    %v70 = vld [vmem:[#allocation5 + $0x8] sm:$0xff]
    %v71 = vld [vmem:[#allocation5 + $0x10] sm:$0xff]
    %v72 = vld [vmem:[#allocation5 + $0x18] sm:$0xff]
    %v73 = vld [vmem:[#allocation5 + $0x20] sm:$0xff]
    %v74 = vld [vmem:[#allocation5 + $0x28] sm:$0xff]
    %v75 = vld [vmem:[#allocation5 + $0x30] sm:$0xff]
    %v76 = vld [vmem:[#allocation5 + $0x38] sm:$0xff]
    %v77 = vld [vmem:[#allocation5 + $0x40] sm:$0xff]
    %v78 = vld [vmem:[#allocation5 + $0x48] sm:$0xff]
    %v79 = vld [vmem:[#allocation5 + $0x50] sm:$0xff]
    %v80 = vld [vmem:[#allocation5 + $0x58] sm:$0xff]
    %v81 = vld [vmem:[#allocation5 + $0x60] sm:$0xff]
    %v82 = vld [vmem:[#allocation5 + $0x68] sm:$0xff]
    %v83 = vld [vmem:[#allocation5 + $0x70] sm:$0xff]
    %v84 = vld [vmem:[#allocation5 + $0x78] sm:$0xff]
    %v85 = vld [vmem:[%s3] sm:$0x1]
    %v87 = vlaneseq
    %v88 = vshrl.u32 %v87, 7
    %v89 = vsub.s32 0, %v88
    %v90 = vrot.slane %v85, %v89
    %92 = vmatprep.subr.mxu0 0.0
    %93 = vmatpush1.msra.mxu0 %v69
    %94 = vmatprep.subr.mxu0 0.0
    %95 = vmatpush1.msra.mxu0 %v70
    %96 = vmatprep.subr.mxu0 0.0
    %97 = vmatpush1.msra.mxu0 %v71
    %98 = vmatprep.subr.mxu0 0.0
    %99 = vmatpush1.msra.mxu0 %v72
    %100 = vmatprep.subr.mxu0 0.0
    %101 = vmatpush1.msra.mxu0 %v73
    %102 = vmatprep.subr.mxu0 0.0
    %103 = vmatpush1.msra.mxu0 %v74
    %104 = vmatprep.subr.mxu0 0.0
    %105 = vmatpush1.msra.mxu0 %v75
    %106 = vmatprep.subr.mxu0 0.0
    %107 = vmatpush1.msra.mxu0 %v76
    %108 = vmatprep.subr.mxu0 0.0
    %109 = vmatpush1.msra.mxu0 %v77
    %110 = vmatprep.subr.mxu0 0.0
    %111 = vmatpush1.msra.mxu0 %v78
    %112 = vmatprep.subr.mxu0 0.0
    %113 = vmatpush1.msra.mxu0 %v79
    %114 = vmatprep.subr.mxu0 0.0
    %115 = vmatpush1.msra.mxu0 %v80
    %116 = vmatprep.subr.mxu0 0.0
    %117 = vmatpush1.msra.mxu0 %v81
    %118 = vmatprep.subr.mxu0 0.0
    %119 = vmatpush1.msra.mxu0 %v82
    %120 = vmatprep.subr.mxu0 0.0
    %121 = vmatpush1.msra.mxu0 %v83
    %122 = vmatprep.subr.mxu0 0.0
    %123 = vmatpush1.msra.mxu0 %v84
    %124 = vmatprep.subr.mxu0 0.0
    %125 = vmatpush1.msra.mxu0 0.0
    %126 = vmatprep.subr.mxu0 0.0
    %127 = vmatpush1.msra.mxu0 0.0
    %128 = vmatprep.subr.mxu0 0.0
    %129 = vmatpush1.msra.mxu0 0.0
    %130 = vmatprep.subr.mxu0 0.0
    %131 = vmatpush1.msra.mxu0 0.0
    %132 = vmatprep.subr.mxu0 0.0
    %133 = vmatpush1.msra.mxu0 0.0
    %134 = vmatprep.subr.mxu0 0.0
    %135 = vmatpush1.msra.mxu0 0.0
    %136 = vmatprep.subr.mxu0 0.0
    %137 = vmatpush1.msra.mxu0 0.0
    %138 = vmatprep.subr.mxu0 0.0
    %139 = vmatpush1.msra.mxu0 0.0
    %140 = vmatprep.subr.mxu0 0.0
    %141 = vmatpush1.msra.mxu0 0.0
    %142 = vmatprep.subr.mxu0 0.0
    %143 = vmatpush1.msra.mxu0 0.0
    %144 = vmatprep.subr.mxu0 0.0
    %145 = vmatpush1.msra.mxu0 0.0
    %146 = vmatprep.subr.mxu0 0.0
    %147 = vmatpush1.msra.mxu0 0.0
    %148 = vmatprep.subr.mxu0 0.0
    %149 = vmatpush1.msra.mxu0 0.0
    %150 = vmatprep.subr.mxu0 0.0
    %151 = vmatpush1.msra.mxu0 0.0
    %152 = vmatprep.subr.mxu0 0.0
    %153 = vmatpush1.msra.mxu0 0.0
    %154 = vmatprep.subr.mxu0 0.0
    %155 = vmatpush1.msra.mxu0 0.0
    %156 = vmatprep.mubr.f32.mxu0 0.0
    %157 = vmatmul.mubr.f32.gmra.mrb[0].mxu0 %v65
    %v158 = vpop.f32.mrb[0].mxu0
    %v159 = vadd.f32 %v90, %v158
    %v160 = vpop.f32.mrb[0].mxu0
    %161 = vmatprep.mubr.f32.mxu0 0.0
    %162 = vmatmul.mubr.f32.gmra.mrb[0].mxu0 %v66
    %v163 = vpop.f32.mrb[0].mxu0
    %v164 = vadd.f32 %v90, %v163
    %v165 = vpop.f32.mrb[0].mxu0
    %166 = vmatprep.mubr.f32.mxu0 0.0
    %167 = vmatmul.mubr.f32.gmra.mrb[0].mxu0 %v67
    %v168 = vpop.f32.mrb[0].mxu0
    %v169 = vadd.f32 %v90, %v168
    %v170 = vpop.f32.mrb[0].mxu0
    %171 = vmatprep.mubr.f32.mxu0 0.0
    %172 = vmatmul.mubr.f32.gmra.mrb[0].mxu0 %v68
    %v173 = vpop.f32.mrb[0].mxu0
    %v174 = vadd.f32 %v90, %v173
    %v175 = vpop.f32.mrb[0].mxu0
    %176 = vdwg.mxu0
    %v177 = vmax.f32 %v159, 0.0
    %v178 = vmax.f32 %v164, 0.0
    %v179 = vmax.f32 %v169, 0.0
    %v180 = vmax.f32 %v174, 0.0
    %v181 = vld [vmem:[#allocation7] sm:$0xff]
    %v182 = vld [vmem:[#allocation7 + $0x8] sm:$0xff]
    %v183 = vld [vmem:[#allocation7 + $0x10] sm:$0xff]
    %v184 = vld [vmem:[#allocation7 + $0x18] sm:$0xff]
    %v185 = vld [vmem:[#allocation7 + $0x20] sm:$0xff]
    %v186 = vld [vmem:[#allocation7 + $0x28] sm:$0xff]
    %v187 = vld [vmem:[#allocation7 + $0x30] sm:$0xff]
    %v188 = vld [vmem:[#allocation7 + $0x38] sm:$0xff]
    %v189 = vld [vmem:[#allocation7 + $0x40] sm:$0xff]
    %v190 = vld [vmem:[#allocation7 + $0x48] sm:$0xff]
    %v191 = vld [vmem:[#allocation7 + $0x50] sm:$0xff]
    %v192 = vld [vmem:[#allocation7 + $0x58] sm:$0xff]
    %v193 = vld [vmem:[#allocation7 + $0x60] sm:$0xff]
    %v194 = vld [vmem:[#allocation7 + $0x68] sm:$0xff]
    %v195 = vld [vmem:[#allocation7 + $0x70] sm:$0xff]
    %v196 = vld [vmem:[#allocation7 + $0x78] sm:$0xff]
    %197 = vmatprep.subr.mxu0 0.0
    %198 = vmatpush1.msra.mxu0 %v181
    %199 = vmatprep.subr.mxu0 0.0
    %200 = vmatpush1.msra.mxu0 %v182
    %201 = vmatprep.subr.mxu0 0.0
    %202 = vmatpush1.msra.mxu0 %v183
    %203 = vmatprep.subr.mxu0 0.0
    %204 = vmatpush1.msra.mxu0 %v184
    %205 = vmatprep.subr.mxu0 0.0
    %206 = vmatpush1.msra.mxu0 %v185
    %207 = vmatprep.subr.mxu0 0.0
    %208 = vmatpush1.msra.mxu0 %v186
    %209 = vmatprep.subr.mxu0 0.0
    %210 = vmatpush1.msra.mxu0 %v187
    %211 = vmatprep.subr.mxu0 0.0
    %212 = vmatpush1.msra.mxu0 %v188
    %213 = vmatprep.subr.mxu0 0.0
    %214 = vmatpush1.msra.mxu0 %v189
    %215 = vmatprep.subr.mxu0 0.0
    %216 = vmatpush1.msra.mxu0 %v190
    %217 = vmatprep.subr.mxu0 0.0
    %218 = vmatpush1.msra.mxu0 %v191
    %219 = vmatprep.subr.mxu0 0.0
    %220 = vmatpush1.msra.mxu0 %v192
    %221 = vmatprep.subr.mxu0 0.0
    %222 = vmatpush1.msra.mxu0 %v193
    %223 = vmatprep.subr.mxu0 0.0
    %224 = vmatpush1.msra.mxu0 %v194
    %225 = vmatprep.subr.mxu0 0.0
    %226 = vmatpush1.msra.mxu0 %v195
    %227 = vmatprep.subr.mxu0 0.0
    %228 = vmatpush1.msra.mxu0 %v196
    %229 = vmatprep.subr.mxu0 0.0
    %230 = vmatpush1.msra.mxu0 0.0
    %231 = vmatprep.subr.mxu0 0.0
    %232 = vmatpush1.msra.mxu0 0.0
    %233 = vmatprep.subr.mxu0 0.0
    %234 = vmatpush1.msra.mxu0 0.0
    %235 = vmatprep.subr.mxu0 0.0
    %236 = vmatpush1.msra.mxu0 0.0
    %237 = vmatprep.subr.mxu0 0.0
    %238 = vmatpush1.msra.mxu0 0.0
    %239 = vmatprep.subr.mxu0 0.0
    %240 = vmatpush1.msra.mxu0 0.0
    %241 = vmatprep.subr.mxu0 0.0
    %242 = vmatpush1.msra.mxu0 0.0
    %243 = vmatprep.subr.mxu0 0.0
    %244 = vmatpush1.msra.mxu0 0.0
    %245 = vmatprep.subr.mxu0 0.0
    %246 = vmatpush1.msra.mxu0 0.0
    %247 = vmatprep.subr.mxu0 0.0
    %248 = vmatpush1.msra.mxu0 0.0
    %249 = vmatprep.subr.mxu0 0.0
    %250 = vmatpush1.msra.mxu0 0.0
    %251 = vmatprep.subr.mxu0 0.0
    %252 = vmatpush1.msra.mxu0 0.0
    %253 = vmatprep.subr.mxu0 0.0
    %254 = vmatpush1.msra.mxu0 0.0
    %255 = vmatprep.subr.mxu0 0.0
    %256 = vmatpush1.msra.mxu0 0.0
    %257 = vmatprep.subr.mxu0 0.0
    %258 = vmatpush1.msra.mxu0 0.0
    %259 = vmatprep.subr.mxu0 0.0
    %260 = vmatpush1.msra.mxu0 0.0
    %261 = vmatprep.mubr.f32.mxu0 0.0
    %262 = vmatmul.mubr.f32.gmra.mrb[0].mxu0 %v177
    %v263 = vpop.f32.mrb[0].mxu0
    %v264 = vadd.f32 0.0, %v263
    %v265 = vpop.f32.mrb[0].mxu0
    %266 = vmatprep.mubr.f32.mxu0 0.0
    %267 = vmatmul.mubr.f32.gmra.mrb[0].mxu0 %v178
    %v268 = vpop.f32.mrb[0].mxu0
    %v269 = vadd.f32 0.0, %v268
    %v270 = vpop.f32.mrb[0].mxu0
    %271 = vmatprep.mubr.f32.mxu0 0.0
    %272 = vmatmul.mubr.f32.gmra.mrb[0].mxu0 %v179
    %v273 = vpop.f32.mrb[0].mxu0
    %v274 = vadd.f32 0.0, %v273
    %v275 = vpop.f32.mrb[0].mxu0
    %276 = vmatprep.mubr.f32.mxu0 0.0
    %277 = vmatmul.mubr.f32.gmra.mrb[0].mxu0 %v180
    %v278 = vpop.f32.mrb[0].mxu0
    %v279 = vadd.f32 0.0, %v278
    %v280 = vpop.f32.mrb[0].mxu0
    %281 = vdwg.mxu0
    %v282 = vld [vmem:[%s1] sm:$0x3]
    %v285 = vunpack.c.l.s4 1966171168
    %v286 = vunpack.c.0.s8 %v285
    %v287 = vlaneseq
    %v288 = vshrl.u32 %v287, 7
    %v289 = vsub.s32 %v286, %v288
    %v290 = vrot.slane %v282, %v289
    %v291 = vcombine.high %v290, %v290
    %v293 = vunpack.c.l.s4 1966171168
    %v294 = vunpack.c.0.s8 %v293
    %v295 = vlaneseq
    %v296 = vshrl.u32 %v295, 7
    %v297 = vsub.s32 %v294, %v296
    %v298 = vrot.slane %v290, %v297
    %v300 = vunpack.c.l.s4 1966171168
    %v301 = vunpack.c.0.s8 %v300
    %v302 = vlaneseq
    %v303 = vshrl.u32 %v302, 7
    %v304 = vsub.s32 %v301, %v303
    %v305 = vrot.slane %v291, %v304
    %v306 = vlaneseq
    %v307 = vshrl.u32 %v306, 7
    %v308 = vsub.s32 0, %v307
    %v309 = vrot.slane %v298, %v308
    %v310 = vlaneseq
    %v311 = vshrl.u32 %v310, 7
    %v312 = vsub.s32 0, %v311
    %v313 = vrot.slane %v305, %v312
    %v316 = vadd.f32 %v264, %v309
    %v317 = vadd.f32 %v269, %v309
    %v318 = vadd.f32 %v274, %v313
    %v319 = vadd.f32 %v279, %v313
    %v320 = vmax.f32 %v316, 0.0
    %v321 = vmax.f32 %v317, 0.0
    %v322 = vmax.f32 %v318, 0.0
    %v323 = vmax.f32 %v319, 0.0
    %v324 = vld [vmem:[%s5] sm:$0x1]
    %v326 = vlaneseq
    %v327 = vshrl.u32 %v326, 7
    %v328 = vsub.s32 0, %v327
    %v329 = vrot.slane %v324, %v328
    %v331 = vmul.f32 %v320, %v329
    %v332 = vmul.f32 %v321, %v329
    %v333 = vmul.f32 %v322, %v329
    %v334 = vmul.f32 %v323, %v329
    %335 = vadd.xlane.f32.xlu0 %v331
    %v336 = vpop.xlane.xlu0 %335
    %337 = vadd.xlane.f32.xlu0 %v332
    %v338 = vpop.xlane.xlu0 %337
    %339 = vadd.xlane.f32.xlu0 %v333
    %v340 = vpop.xlane.xlu0 %339
    %341 = vadd.xlane.f32.xlu0 %v334
    %v342 = vpop.xlane.xlu0 %341
    %v343 = vmax.f32 %v336, %v338
    %v344 = vrot.slane %v343, 4
    %v345 = vmax.f32 %v343, %v344
    %v346 = vrot.slane %v345, 2
    %v347 = vmax.f32 %v345, %v346
    %v348 = vrot.slane %v347, 1
    %v349 = vmax.f32 %v347, %v348
    %v350 = vmax.f32 %v340, %v342
    %v351 = vrot.slane %v350, 4
    %v352 = vmax.f32 %v350, %v351
    %v353 = vrot.slane %v352, 2
    %v354 = vmax.f32 %v352, %v353
    %v355 = vrot.slane %v354, 1
    %v356 = vmax.f32 %v354, %v355
    %v357 = vsub.f32 %v336, %v349
    %v358 = vsub.f32 %v338, %v349
    %v359 = vsub.f32 %v340, %v356
    %v360 = vsub.f32 %v342, %v356
    %v361 = vmul.f32 %v357, 1.442695
    %v362 = vpow.pop %v361
    %v363 = vmul.f32 %v358, 1.442695
    %v364 = vpow.pop %v363
    %v365 = vmul.f32 %v359, 1.442695
    %v366 = vpow.pop %v365
    %v367 = vmul.f32 %v360, 1.442695
    %v368 = vpow.pop %v367
    %v369 = vadd.f32 %v362, %v364
    %v370 = vrot.slane %v369, 4
    %v371 = vadd.f32 %v369, %v370
    %v372 = vrot.slane %v371, 2
    %v373 = vadd.f32 %v371, %v372
    %v374 = vrot.slane %v373, 1
    %v375 = vadd.f32 %v373, %v374
    %v376 = vadd.f32 %v366, %v368
    %v377 = vrot.slane %v376, 4
    %v378 = vadd.f32 %v376, %v377
    %v379 = vrot.slane %v378, 2
    %v380 = vadd.f32 %v378, %v379
    %v381 = vrot.slane %v380, 1
    %v382 = vadd.f32 %v380, %v381
    %v383 = vrcp.pop %v375
    %v384 = vrcp.pop %v382
    %v385 = vmul.f32 %v362, %v383
    %v386 = vmul.f32 %v364, %v383
    %v387 = vmul.f32 %v366, %v384
    %v388 = vmul.f32 %v368, %v384
    %v389 = vmul.f32 %v65, %v385
    %v390 = vmul.f32 %v66, %v386
    %v391 = vmul.f32 %v67, %v387
    %v392 = vmul.f32 %v68, %v388
    %v393 = vadd.f32 %v389, %v390
    %v394 = vrot.slane %v393, 4
    %v395 = vadd.f32 %v393, %v394
    %v396 = vrot.slane %v395, 2
    %v397 = vadd.f32 %v395, %v396
    %v398 = vrot.slane %v397, 1
    %v399 = vadd.f32 %v397, %v398
    %v400 = vadd.f32 %v391, %v392
    %v401 = vrot.slane %v400, 4
    %v402 = vadd.f32 %v400, %v401
    %v403 = vrot.slane %v402, 2
    %v404 = vadd.f32 %v402, %v403
    %v405 = vrot.slane %v404, 1
    %v406 = vadd.f32 %v404, %v405
    %vm409 = vcmask 1041409
    %v410 = vsel %vm409, %v406, %v399
    %412 = vst [vmem:[#allocation8] sm:$0x3] %v410
    // Predicated region
    $region38: #{tpu_custom_call.1} parent=1 // pred_check
      _
    $region39: #{tpu_custom_call.1} parent=1 // pred_check_branch
      %414 = sbr.rel (0) target = $region41
    $region40: #{tpu_custom_call.1} parent=1 // pred_region
      %s416 = ssub.s32 32, 32
      %417 = vsyncadd [#allocation4], %s416
      %s419 = sshll.u32 [#allocation8], 4
      %s420 = int_to_ptr.vmem [resolvable:$true] %s419
      %422 = dma.vmem_to_hbm [thread:$0]  %s420, 32, %s6, [#allocation4]
    $region41: #{tpu_custom_call.1} parent=1 // pred_fallthru
      _
    // Predicated region
    $region42: #{tpu_custom_call.1} parent=1 // pred_check
      _
    $region43: #{tpu_custom_call.1} parent=1 // pred_check_branch
      %424 = sbr.rel (0) target = $region45
    $region44: #{tpu_custom_call.1} parent=1 // pred_region
      %425 = dma.done [#allocation4], 32
    $region45: #{tpu_custom_call.1} parent=1 // pred_fallthru
      _
    %426 = vsyncpa [#allocation3], 1
    %427 = vsyncpa [#allocation6], 1
    %428 = vsyncpa [#allocation4], 1

</llo_original>
